<compile_context>
chip_gen: v7x
topology: tpu7x:2x2x1
jax: 0.10.0
libtpu: 0.0.40
codegen_flags: <defaults>
</compile_context>

<pallas_src>
import functools

import jax
import jax.numpy as jnp
from jax.experimental import pallas as pl
from jax.experimental.pallas import tpu as pltpu


def _round_up(x, m):
    return (x + m - 1) // m * m


def _l_color_kernel(x_ref, o_ref, acc_ref, *, hw, lane_tile, mask_last):
    """x_ref: (bblk, 3, lane_tile) tile; o_ref: (bblk, 1); acc_ref: f32 scratch."""
    k = pl.program_id(1)

    @pl.when(k == 0)
    def _init():
        acc_ref[...] = jnp.zeros_like(acc_ref)

    x = x_ref[...]
    if x.dtype != jnp.float32:
        x = x.astype(jnp.float32)
    if mask_last:
        # hw is not a multiple of lane_tile: zero out the out-of-range lanes of
        # the (padded) edge tile so they do not pollute the channel sums.
        lane = jax.lax.broadcasted_iota(jnp.int32, x.shape, 2)
        x = jnp.where(k * lane_tile + lane < hw, x, 0.0)

    # Per-step work is a pure VALU add; it hides under the HBM->VMEM DMA.
    acc_ref[...] += x

    @pl.when(k == pl.num_programs(1) - 1)
    def _finalize():
        # One XLU cross-lane reduce + one sqrt per batch block.
        sums = jnp.sum(acc_ref[...], axis=-1)            # (bblk, 3)
        mean = sums * jnp.float32(1.0 / hw)              # padded lanes are zero
        mr = mean[:, 0:1]
        mg = mean[:, 1:2]
        mb = mean[:, 2:3]
        drg = (mr - mg) ** 2
        drb = (mr - mb) ** 2
        dgb = (mb - mg) ** 2
        kk = jnp.sqrt(drg * drg + drb * drb + dgb * dgb)  # (bblk, 1)
        o_ref[...] = kk.astype(o_ref.dtype)


def l_color(x, *, lane_tile_cap=2048, row_budget=65536):
    """x: (B, 3, H, W) float32/bfloat16 -> (B, 1, 1, 1) float32."""
    b, c, h, w = x.shape
    assert c == 3, "L_color expects 3-channel (RGB) input"
    hw = h * w
    xf = x.reshape(b, c, hw)  # free metadata reshape for contiguous NCHW

    # Spatial tiling: full extent when small, otherwise lane-dense 128-multiple
    # tiles with in-kernel masking of the ragged edge tile.
    if hw <= lane_tile_cap:
        lane_tile = hw
    else:
        lane_tile = lane_tile_cap            # multiple of 128
    n_tiles = pl.cdiv(hw, lane_tile)
    mask_last = (hw % lane_tile) != 0

    # Batch packing: pack the whole batch per step when small, else blocks of a
    # multiple of 8 rows (keeps the output BlockSpec sublane-aligned).
    if b * lane_tile <= row_budget:
        bblk = b
    else:
        # Here b > row_budget // lane_tile >= bblk, so bblk <= b and bblk % 8 == 0.
        bblk = max(8, (row_budget // lane_tile) // 8 * 8)
    n_bblk = pl.cdiv(b, bblk)

    kernel = functools.partial(
        _l_color_kernel, hw=hw, lane_tile=lane_tile, mask_last=mask_last
    )

    itemsize = jnp.dtype(x.dtype).itemsize
    cost = pl.CostEstimate(
        flops=3 * b * hw + 32 * b,
        transcendentals=b,
        bytes_accessed=b * c * hw * itemsize + b * 4,
    )

    out = pl.pallas_call(
        kernel,
        out_shape=jax.ShapeDtypeStruct((b, 1), jnp.float32),
        grid_spec=pltpu.PrefetchScalarGridSpec(
            num_scalar_prefetch=0,
            grid=(n_bblk, n_tiles),
            in_specs=[pl.BlockSpec((bblk, c, lane_tile), lambda i, k: (i, 0, k))],
            out_specs=pl.BlockSpec((bblk, 1), lambda i, k: (i, 0)),
            scratch_shapes=[pltpu.VMEM((bblk, c, lane_tile), jnp.float32)],
        ),
        compiler_params=pltpu.CompilerParams(
            dimension_semantics=("parallel", "arbitrary"),
        ),
        cost_estimate=cost,
    )(xf)
    return out.reshape(b, 1, 1, 1)


def l_color_ref(x):
    # pure-JAX reference mirroring the torch forward
    mean_rgb = jnp.mean(x.astype(jnp.float32), axis=(2, 3), keepdims=True)
    mr = mean_rgb[:, 0:1]
    mg = mean_rgb[:, 1:2]
    mb = mean_rgb[:, 2:3]
    drg = (mr - mg) ** 2
    drb = (mr - mb) ** 2
    dgb = (mb - mg) ** 2
    return jnp.sqrt(drg ** 2 + drb ** 2 + dgb ** 2)  # (B,1,1,1)


def _check(x, **kwargs):
    out = jax.block_until_ready(l_color(x, **kwargs))
    ref = l_color_ref(x)
    assert out.shape == ref.shape, (out.shape, ref.shape)
    assert jnp.allclose(out, ref, atol=1e-6, rtol=1e-4), (out, ref)


if __name__ == "__main__":
    key = jax.random.PRNGKey(0)
    k1, k2, k3 = jax.random.split(key, 3)

    # 1) basic path: whole image + whole batch in one grid step
    x1 = jax.random.uniform(k1, (2, 3, 16, 16), dtype=jnp.float32)
    _check(x1)

    # 2) spatial-tiled path with masked ragged edge tile (hw=300, tile=128)
    x2 = jax.random.uniform(k2, (2, 3, 10, 30), dtype=jnp.float32)
    _check(x2, lane_tile_cap=128)

    # 3) batch-blocked path with a partial trailing batch block
    x3 = jax.random.uniform(k3, (9, 3, 8, 16), dtype=jnp.float32)
    _check(x3, row_budget=512)

    print("KERNEL_OK")
</pallas_src>

<mosaic_0001>
module attributes {stable_mosaic.version = 11 : i64} {
  func.func @_l_color_kernel(%arg0: i32, %arg1: i32, %arg2: memref<2x3x256xf32, #tpu.memory_space<vmem>>, %arg3: memref<2x1xf32, #tpu.memory_space<vmem>>, %arg4: memref<2x3x256xf32, #tpu.memory_space<vmem>>) attributes {dimension_semantics = [#tpu.dimension_semantics<parallel>, #tpu.dimension_semantics<arbitrary>], iteration_bounds = array<i64: 1, 1>, scalar_prefetch = 0 : i64, scratch_operands = 1 : i64, tpu.core_type = #tpu.core_type<tc>, window_params = [{transform_indices = @transform_0, window_bounds = array<i64: 2, 3, 256>}, {transform_indices = @transform_1, window_bounds = array<i64: 2, 1>}]} {
    %c0_i32 = arith.constant 0 : i32
    %0 = arith.cmpi eq, %arg1, %c0_i32 : i32
    %1 = arith.extui %0 : i1 to i32
    %c0_i32_0 = arith.constant 0 : i32
    %2 = arith.cmpi ne, %1, %c0_i32_0 : i32
    scf.if %2 {
      %cst = arith.constant 0.000000e+00 : f32
      %10 = vector.broadcast %cst : f32 to vector<2x3x256xf32>
      %c0_11 = arith.constant 0 : index
      %c0_12 = arith.constant 0 : index
      %c0_13 = arith.constant 0 : index
      %11 = vector.load %arg4[%c0_11, %c0_12, %c0_13] : memref<2x3x256xf32, #tpu.memory_space<vmem>>, vector<2x3x256xf32>
      tpu.vector_store %arg4[%c0_11, %c0_12, %c0_13], %10 {strides = array<i32>} : memref<2x3x256xf32, #tpu.memory_space<vmem>>, vector<2x3x256xf32>,
    } else {
    }
    %c0 = arith.constant 0 : index
    %c0_1 = arith.constant 0 : index
    %c0_2 = arith.constant 0 : index
    %3 = vector.load %arg2[%c0, %c0_1, %c0_2] : memref<2x3x256xf32, #tpu.memory_space<vmem>>, vector<2x3x256xf32>
    %c0_3 = arith.constant 0 : index
    %c0_4 = arith.constant 0 : index
    %c0_5 = arith.constant 0 : index
    %4 = vector.load %arg4[%c0_3, %c0_4, %c0_5] : memref<2x3x256xf32, #tpu.memory_space<vmem>>, vector<2x3x256xf32>
    %5 = arith.addf %4, %3 : vector<2x3x256xf32>
    %c0_6 = arith.constant 0 : index
    %c0_7 = arith.constant 0 : index
    %c0_8 = arith.constant 0 : index
    %6 = vector.load %arg4[%c0_6, %c0_7, %c0_8] : memref<2x3x256xf32, #tpu.memory_space<vmem>>, vector<2x3x256xf32>
    tpu.vector_store %arg4[%c0_6, %c0_7, %c0_8], %5 {strides = array<i32>} : memref<2x3x256xf32, #tpu.memory_space<vmem>>, vector<2x3x256xf32>,
    %c0_i32_9 = arith.constant 0 : i32
    %7 = arith.cmpi eq, %arg1, %c0_i32_9 : i32
    %8 = arith.extui %7 : i1 to i32
    %c0_i32_10 = arith.constant 0 : i32
    %9 = arith.cmpi ne, %8, %c0_i32_10 : i32
    scf.if %9 {
      %c0_11 = arith.constant 0 : index
      %c0_12 = arith.constant 0 : index
      %c0_13 = arith.constant 0 : index
      %10 = vector.load %arg4[%c0_11, %c0_12, %c0_13] : memref<2x3x256xf32, #tpu.memory_space<vmem>>, vector<2x3x256xf32>
      %cst = arith.constant dense<0.000000e+00> : vector<2x3xf32>
      %11 = vector.multi_reduction <add>, %10, %cst [2] : vector<2x3x256xf32> to vector<2x3xf32>
      %cst_14 = arith.constant 3.906250e-03 : f32
      %12 = vector.broadcast %cst_14 : f32 to vector<2x3xf32>
      %13 = arith.mulf %11, %12 : vector<2x3xf32>
      %14 = vector.extract_strided_slice %13 {offsets = [0, 0], sizes = [2, 1], strides = [1, 1]} : vector<2x3xf32> to vector<2x1xf32>
      %15 = vector.extract_strided_slice %13 {offsets = [0, 1], sizes = [2, 1], strides = [1, 1]} : vector<2x3xf32> to vector<2x1xf32>
      %16 = vector.extract_strided_slice %13 {offsets = [0, 2], sizes = [2, 1], strides = [1, 1]} : vector<2x3xf32> to vector<2x1xf32>
      %17 = arith.subf %14, %15 : vector<2x1xf32>
      %18 = arith.mulf %17, %17 : vector<2x1xf32>
      %19 = arith.subf %14, %16 : vector<2x1xf32>
      %20 = arith.mulf %19, %19 : vector<2x1xf32>
      %21 = arith.subf %16, %15 : vector<2x1xf32>
      %22 = arith.mulf %21, %21 : vector<2x1xf32>
      %23 = arith.mulf %18, %18 : vector<2x1xf32>
      %24 = arith.mulf %20, %20 : vector<2x1xf32>
      %25 = arith.addf %23, %24 : vector<2x1xf32>
      %26 = arith.mulf %22, %22 : vector<2x1xf32>
      %27 = arith.addf %25, %26 : vector<2x1xf32>
      %28 = math.sqrt %27 : vector<2x1xf32>
      %c0_15 = arith.constant 0 : index
      %c0_16 = arith.constant 0 : index
      %29 = vector.load %arg3[%c0_15, %c0_16] : memref<2x1xf32, #tpu.memory_space<vmem>>, vector<2x1xf32>
      tpu.vector_store %arg3[%c0_15, %c0_16], %28 {strides = array<i32>} : memref<2x1xf32, #tpu.memory_space<vmem>>, vector<2x1xf32>,
    } else {
    }
    return
  }
  func.func @transform_0(%arg0: i32, %arg1: i32) -> (i32, i32, i32) {
    %c0_i32 = arith.constant 0 : i32
    %c0_i32_0 = arith.constant 0 : i32
    return %arg0, %c0_i32, %arg1 : i32, i32, i32
  }
  func.func @transform_1(%arg0: i32, %arg1: i32) -> (i32, i32) {
    %c0_i32 = arith.constant 0 : i32
    %c0_i32_0 = arith.constant 0 : i32
    return %arg0, %c0_i32 : i32, i32
  }
}

</mosaic_0001>

<llo_original>
// kernel: tpu_custom_call.1
$region0: #{tpu_custom_call.1}
  #allocation0 [shape = 'u32[]', space=smem, size = 0x4, offset = 0x4, fixed_abs, tag = 'smem constant byte address 0x4 - core index']
  #allocation1 [shape = 'u32[144,128]{1,0:T(1,128)}', space=vmem, size = 0x12000, scoped, tag = 'internal scratch']
  #allocation2 [shape = 'f32[2,3,256]{2,1,0:T(4,128)}', space=vmem, size = 0x2000, scoped, tag = 'scratch operand']
  %s0 = inlined_call_operand.vmem [shape: f32[2,3,256], index: 0, kind: input, shape index: {}]
  %s1 = inlined_call_operand.vmem [shape: f32[2,1], index: 1, kind: output, shape index: {}]
  %s2 = sld [smem:[#allocation0]]
  $region22: #{tpu_custom_call.1} parent=0
    _
  %s4 = ssub.s32 1, %s2
  %s5 = scalar_select 0, %s4, %s2
  // Predicated region
  $region2: #{tpu_custom_call.1} parent=0 // pred_check
    _
  $region3: #{tpu_custom_call.1} parent=0 // pred_check_branch
    %7 = sbr.rel (0) target = $region5
  $region4: #{tpu_custom_call.1} parent=0 // pred_region
    _
  $region5: #{tpu_custom_call.1} parent=0 // pred_fallthru
    _
  %p8 = scmp.eq.s32.totalorder 0, 0
  // Predicated region
  $region6: #{tpu_custom_call.1} parent=0 // pred_check
    %p9 = pneg %p8
  $region7: #{tpu_custom_call.1} parent=0 // pred_check_branch
    %11 = sbr.rel (%p9) target = $region9
  $region8: #{tpu_custom_call.1} parent=0 // pred_region
    %12 = vst [vmem:[#allocation2] sm:$0x77] 0.0
    %13 = vst [vmem:[#allocation2 + $0x8] sm:$0x77] 0.0
  $region9: #{tpu_custom_call.1} parent=0 // pred_fallthru
    _
  %v14 = vld [vmem:[%s0] sm:$0x77]
  %v15 = vld [vmem:[%s0 + $0x8] sm:$0x77]
  %v16 = vld [vmem:[#allocation2] sm:$0x77]
  %v17 = vld [vmem:[#allocation2 + $0x8] sm:$0x77]
  %v18 = vadd.f32 %v16, %v14
  %v19 = vadd.f32 %v17, %v15
  %20 = vst [vmem:[#allocation2] sm:$0x77] %v18
  %21 = vst [vmem:[#allocation2 + $0x8] sm:$0x77] %v19
  // Predicated region
  $region10: #{tpu_custom_call.1} parent=0 // pred_check
    %p22 = pneg %p8
  $region11: #{tpu_custom_call.1} parent=0 // pred_check_branch
    %24 = sbr.rel (%p22) target = $region13
  $region12: #{tpu_custom_call.1} parent=0 // pred_region
    %v25 = vld [vmem:[#allocation2] sm:$0x77]
    %v26 = vld [vmem:[#allocation2 + $0x8] sm:$0x77]
    %v29 = vcombine.high %v25, %v25
    %v30 = vcombine.high %v26, %v26
    %vm33 = vcmask 1042432
    %v34 = vsel %vm33, %v25, 0.0
    %v35 = vsel %vm33, %v29, 0.0
    %v36 = vadd.f32 %v34, %v35
    %37 = vadd.xlane.f32.xlu0 %v36
    %v38 = vpop.xlane.xlu0 %37
    %v39 = vsel %vm33, %v26, 0.0
    %v40 = vsel %vm33, %v30, 0.0
    %v41 = vadd.f32 %v39, %v40
    %42 = vadd.xlane.f32.xlu0 %v41
    %v43 = vpop.xlane.xlu0 %42
    %v44 = vmul.f32 %v38, 0.00390625
    %v45 = vmul.f32 %v43, 0.00390625
    %v48 = vrot.slane %v44, 1
    %v49 = vrot.slane %v45, 1
    %v52 = vsub.f32 %v44, %v48
    %v53 = vsub.f32 %v45, %v49
    %v54 = vmul.f32 %v52, %v52
    %v55 = vmul.f32 %v53, %v53
    %v56 = vrot.slane %v44, 2
    %v57 = vrot.slane %v45, 2
    %v60 = vsub.f32 %v44, %v56
    %v61 = vsub.f32 %v45, %v57
    %v62 = vmul.f32 %v60, %v60
    %v63 = vmul.f32 %v61, %v61
    %v64 = vrot.slane %v44, 7
    %v65 = vrot.slane %v45, 7
    %v68 = vsub.f32 %v44, %v64
    %v69 = vsub.f32 %v45, %v65
    %v70 = vmul.f32 %v68, %v68
    %v71 = vmul.f32 %v69, %v69
    %v72 = vmul.f32 %v54, %v54
    %v73 = vmul.f32 %v55, %v55
    %v74 = vmul.f32 %v62, %v62
    %v75 = vmul.f32 %v63, %v63
    %v76 = vadd.f32 %v72, %v74
    %v77 = vadd.f32 %v73, %v75
    %v78 = vmul.f32 %v70, %v70
    %v79 = vmul.f32 %v71, %v71
    %v82 = vrot.slane %v78, 2
    %v83 = vrot.slane %v79, 2
    %v86 = vadd.f32 %v76, %v82
    %v87 = vadd.f32 %v77, %v83
    %v88 = vrsqrt.pop %v86
    %v89 = vmul.f32 %v86, %v88
    %vm90 = vcmp.eq.f32.partialorder %v86, inf
    %v91 = vsel %vm90, %v86, %v89
    %vm92 = vcmp.eq.f32.partialorder %v86, 0.0
    %v93 = vand.u32 %v86, 2147483648
    %v94 = vsel %vm92, %v93, %v91
    %v95 = vrsqrt.pop %v87
    %v96 = vmul.f32 %v87, %v95
    %vm97 = vcmp.eq.f32.partialorder %v87, inf
    %v98 = vsel %vm97, %v87, %v96
    %vm99 = vcmp.eq.f32.partialorder %v87, 0.0
    %v100 = vand.u32 %v87, 2147483648
    %v101 = vsel %vm99, %v100, %v98
    %v104 = vrot.slane %v101, 7
    %vm105 = vcmask 1041409
    %v106 = vsel %vm105, %v104, %v94
    %vm108 = vcmask 1024
    %109 = vst.msk [vmem:[%s1] sm:$0x3] %vm108, %v106
  $region13: #{tpu_custom_call.1} parent=0 // pred_fallthru
    _
  // Predicated region
  $region14: #{tpu_custom_call.1} parent=0 // pred_check
    _
  $region15: #{tpu_custom_call.1} parent=0 // pred_check_branch
    %111 = sbr.rel (0) target = $region17
  $region16: #{tpu_custom_call.1} parent=0 // pred_region
    _
  $region17: #{tpu_custom_call.1} parent=0 // pred_fallthru
    _
  // Predicated region
  $region18: #{tpu_custom_call.1} parent=0 // pred_check
    _
  $region19: #{tpu_custom_call.1} parent=0 // pred_check_branch
    %113 = sbr.rel (0) target = $region21
  $region20: #{tpu_custom_call.1} parent=0 // pred_region
    _
  $region21: #{tpu_custom_call.1} parent=0 // pred_fallthru
    _

</llo_original>
